<compile_context>
chip_gen: v5e
topology: v5e:2x2
jax: 0.10.0
libtpu: 0.0.40
codegen_flags: <defaults>
</compile_context>

<pallas_src>
import math

import jax
import jax.numpy as jnp
from jax import lax
from jax.experimental import pallas as pl
from jax.experimental.pallas import tpu as pltpu


def _round_up(x, m):
    return ((x + m - 1) // m) * m


def _choose_tile(size, unit, max_tile):
    """Pad `size` to a multiple of `unit`; pick the largest tile <= max_tile
    (a multiple of `unit`) that divides the padded size."""
    padded = _round_up(size, unit)
    if padded <= max_tile:
        return padded, padded
    for t in range(max_tile, unit - 1, -unit):
        if padded % t == 0:
            return t, padded
    return unit, padded  # `unit` always divides `padded`


def _maybe_pad(x, pad_widths):
    """jnp.pad only if some width is non-zero (avoid a no-op HBM copy)."""
    if all(lo == 0 and hi == 0 for lo, hi in pad_widths):
        return x
    return jnp.pad(x, pad_widths)


def _ocr_ptr_kernel(qp_ref, k_ref, wk_ref, bk_ref, bias_ref, o_ref, kproj_ref):
    """One grid step = (batch b, key-tile kt, query-tile qt).

    qp_ref:    [1, tq, Dk] bf16   pre-projected, pre-scaled query tile
    k_ref:     [1, tk, H ] bf16   raw key tile
    wk_ref:    [H, Dk]     bf16   key projection weight (pre-transposed)
    bk_ref:    [1, Dk]     f32    key projection bias
    bias_ref:  [1, 1, tk]  f32    additive attention-mask bias
    o_ref:     [1, tq, tk] f32    output scores tile
    kproj_ref: [tk, Dk]    bf16   VMEM cache of the projected key tile
    """
    qt = pl.program_id(2)

    # Project the key tile once per (b, kt); reuse for every query tile.
    @pl.when(qt == 0)
    def _():
        kp = jnp.dot(k_ref[0], wk_ref[...], preferred_element_type=jnp.float32)
        kproj_ref[...] = (kp + bk_ref[...]).astype(kproj_ref.dtype)

    # scores = Q_proj @ K_proj^T without materializing a transpose:
    # contract the Dk axis of both operands on the MXU, accumulate in f32.
    scores = lax.dot_general(
        qp_ref[0], kproj_ref[...],
        dimension_numbers=(((1,), (1,)), ((), ())),
        preferred_element_type=jnp.float32)            # [tq, tk]

    o_ref[0] = (scores + bias_ref[0]).astype(o_ref.dtype)


def ocr_ptr_net(query_inputs, key_inputs, wq, bq, wk, bk, attention_mask=None,
                *, tq_max=256, tk_max=512):
    """JAX/Pallas equivalent of OcrPtrNet.forward.

    query_inputs: [B, Tq, H] or [B, H]   key_inputs: [B, Tk, H]
    wq, wk: [Dk, H] (torch nn.Linear layout); bq, bk: [Dk]
    attention_mask: [B, Tk] or None
    returns: [B, Tq, Tk] float32 (or [B, Tk] if query_inputs was 2-D)
    """
    squeeze_result = False
    if query_inputs.ndim == 2:
        query_inputs = query_inputs[:, None, :]
        squeeze_result = True

    B, Tq, H = query_inputs.shape
    _, Tk, _ = key_inputs.shape
    Dk = wq.shape[0]
    scale = 1.0 / math.sqrt(Dk)

    # ---- tiling: sublane-aligned Tq tiles, lane-dense (x128) Tk tiles ----
    tq, tq_pad = _choose_tile(Tq, 8, tq_max)
    tk, tk_pad = _choose_tile(Tk, 128, tk_max)
    n_qt = tq_pad // tq
    n_kt = tk_pad // tk

    # ---- Q projection: one MXU-filling GEMM over B*Tq rows; fold 1/sqrt(Dk)
    #      into the (parameter-sized) weight/bias once. ----
    wq_s = (wq.T * scale).astype(jnp.bfloat16)           # [H, Dk]
    bq_s = (bq * scale).astype(jnp.float32)               # [Dk]
    q2 = query_inputs.reshape(B * Tq, H).astype(jnp.bfloat16)
    q_proj = jnp.dot(q2, wq_s, preferred_element_type=jnp.float32) + bq_s
    q_proj = q_proj.reshape(B, Tq, Dk)
    q_proj = _maybe_pad(q_proj, ((0, 0), (0, tq_pad - Tq), (0, 0)))
    q_proj = q_proj.astype(jnp.bfloat16)                  # [B, tq_pad, Dk]

    # ---- K side stays fused in the kernel (raw keys read once from HBM) ----
    key_p = _maybe_pad(key_inputs.astype(jnp.bfloat16),
                       ((0, 0), (0, tk_pad - Tk), (0, 0)))  # [B, tk_pad, H]
    wk_t = wk.T.astype(jnp.bfloat16)                       # [H, Dk]
    bk2 = bk.reshape(1, Dk).astype(jnp.float32)

    # ---- additive mask bias, precomputed once, lane-dense [B, 1, tk_pad] ----
    if attention_mask is None:
        bias = jnp.zeros((B, Tk), jnp.float32)
    else:
        bias = (1.0 - attention_mask.astype(jnp.float32)) * -10000.0
    bias = _maybe_pad(bias, ((0, 0), (0, tk_pad - Tk))).reshape(B, 1, tk_pad)

    flops = 2 * B * (tk_pad * H * Dk + tq_pad * tk_pad * Dk)
    bytes_accessed = (q_proj.size * 2 + key_p.size * 2 + wk_t.size * 2 +
                      bk2.size * 4 + bias.size * 4 + B * tq_pad * tk_pad * 4)

    out = pl.pallas_call(
        _ocr_ptr_kernel,
        out_shape=jax.ShapeDtypeStruct((B, tq_pad, tk_pad), jnp.float32),
        grid_spec=pltpu.PrefetchScalarGridSpec(
            num_scalar_prefetch=0,
            grid=(B, n_kt, n_qt),
            in_specs=[
                pl.BlockSpec((1, tq, Dk), lambda b, kt, qt: (b, qt, 0)),  # q_proj
                pl.BlockSpec((1, tk, H), lambda b, kt, qt: (b, kt, 0)),   # key
                pl.BlockSpec((H, Dk), lambda b, kt, qt: (0, 0)),          # Wk^T
                pl.BlockSpec((1, Dk), lambda b, kt, qt: (0, 0)),          # bk
                pl.BlockSpec((1, 1, tk), lambda b, kt, qt: (b, 0, kt)),   # bias
            ],
            out_specs=pl.BlockSpec((1, tq, tk), lambda b, kt, qt: (b, qt, kt)),
            scratch_shapes=[pltpu.VMEM((tk, Dk), jnp.bfloat16)],
        ),
        compiler_params=pltpu.CompilerParams(
            dimension_semantics=("parallel", "parallel", "arbitrary"),
            vmem_limit_bytes=48 * 1024 * 1024),
        cost_estimate=pl.CostEstimate(
            flops=int(flops), transcendentals=0,
            bytes_accessed=int(bytes_accessed)),
    )(q_proj, key_p, wk_t, bk2, bias)

    out = out[:, :Tq, :Tk]
    if squeeze_result:
        out = out[:, 0, :]
    return out


def _reference(query_inputs, key_inputs, wq, bq, wk, bk, attention_mask):
    # Pure-JAX (f32) reference mirroring the torch forward.
    squeeze_result = False
    if query_inputs.ndim == 2:
        query_inputs = query_inputs[:, None, :]
        squeeze_result = True
    q = query_inputs @ wq.T + bq
    k = key_inputs @ wk.T + bk
    s = jnp.einsum("bqd,bkd->bqk", q, k) / math.sqrt(wq.shape[0])
    if attention_mask is not None:
        s = s + ((1.0 - attention_mask) * -10000.0)[:, None, :]
    if squeeze_result:
        s = s[:, 0, :]
    return s


if __name__ == "__main__":
    B, Tq, Tk, H = 2, 8, 16, 32
    Dk = H  # query_key_size defaults to hidden_size

    key = jax.random.PRNGKey(0)
    k1, k2, k3, k4, k5, k6, k7 = jax.random.split(key, 7)

    # nn.Linear shapes: weight [Dk, H], bias [Dk].
    wq = jax.random.normal(k1, (Dk, H), dtype=jnp.float32) * 0.05
    bq = jax.random.normal(k2, (Dk,), dtype=jnp.float32) * 0.01
    wk = jax.random.normal(k3, (Dk, H), dtype=jnp.float32) * 0.05
    bk = jax.random.normal(k4, (Dk,), dtype=jnp.float32) * 0.01

    query_inputs = jax.random.normal(k5, (B, Tq, H), dtype=jnp.float32)
    key_inputs = jax.random.normal(k6, (B, Tk, H), dtype=jnp.float32)
    attention_mask = (jax.random.uniform(k7, (B, Tk)) > 0.3).astype(jnp.float32)

    out = ocr_ptr_net(query_inputs, key_inputs, wq, bq, wk, bk, attention_mask)
    out = jax.block_until_ready(out)

    ref = _reference(query_inputs, key_inputs, wq, bq, wk, bk, attention_mask)
    assert out.shape == (B, Tq, Tk), out.shape
    # bf16 matmul inputs with f32 accumulation -> small rounding vs f32 ref.
    assert jnp.allclose(out, ref, atol=2e-2, rtol=2e-2), "mismatch vs reference"

    # Also exercise the 2-D query path (unsqueeze/squeeze behaviour).
    q2d = query_inputs[:, 0, :]
    out2d = jax.block_until_ready(
        ocr_ptr_net(q2d, key_inputs, wq, bq, wk, bk, attention_mask))
    ref2d = _reference(q2d, key_inputs, wq, bq, wk, bk, attention_mask)
    assert out2d.shape == (B, Tk)
    assert jnp.allclose(out2d, ref2d, atol=2e-2, rtol=2e-2)

    # No-mask path.
    out_nm = jax.block_until_ready(
        ocr_ptr_net(query_inputs, key_inputs, wq, bq, wk, bk, None))
    ref_nm = _reference(query_inputs, key_inputs, wq, bq, wk, bk, None)
    assert jnp.allclose(out_nm, ref_nm, atol=2e-2, rtol=2e-2)

    print("KERNEL_OK")
</pallas_src>

<mosaic_0001>
module attributes {stable_mosaic.version = 11 : i64} {
  func.func @_ocr_ptr_kernel(%arg0: i32, %arg1: i32, %arg2: i32, %arg3: memref<1x8x32xbf16, #tpu.memory_space<vmem>>, %arg4: memref<1x128x32xbf16, #tpu.memory_space<vmem>>, %arg5: memref<32x32xbf16, #tpu.memory_space<vmem>>, %arg6: memref<1x32xf32, #tpu.memory_space<vmem>>, %arg7: memref<1x1x128xf32, #tpu.memory_space<vmem>>, %arg8: memref<1x8x128xf32, #tpu.memory_space<vmem>>, %arg9: memref<128x32xbf16, #tpu.memory_space<vmem>>) attributes {dimension_semantics = [#tpu.dimension_semantics<parallel>, #tpu.dimension_semantics<parallel>, #tpu.dimension_semantics<arbitrary>], iteration_bounds = array<i64: 2, 1, 1>, scalar_prefetch = 0 : i64, scratch_operands = 1 : i64, tpu.core_type = #tpu.core_type<tc>, window_params = [{transform_indices = @transform_0, window_bounds = array<i64: 1, 8, 32>}, {transform_indices = @transform_1, window_bounds = array<i64: 1, 128, 32>}, {pipeline_mode = #tpu.pipeline_mode<synchronous>, transform_indices = @transform_2, window_bounds = array<i64: 32, 32>}, {pipeline_mode = #tpu.pipeline_mode<synchronous>, transform_indices = @transform_3, window_bounds = array<i64: 1, 32>}, {transform_indices = @transform_4, window_bounds = array<i64: 1, 1, 128>}, {transform_indices = @transform_5, window_bounds = array<i64: 1, 8, 128>}]} {
    %c0_i32 = arith.constant 0 : i32
    %0 = arith.cmpi eq, %arg2, %c0_i32 : i32
    %1 = arith.extui %0 : i1 to i32
    %c0_i32_0 = arith.constant 0 : i32
    %2 = arith.cmpi ne, %1, %c0_i32_0 : i32
    scf.if %2 {
      %c0_11 = arith.constant 0 : index
      %c0_12 = arith.constant 0 : index
      %c0_13 = arith.constant 0 : index
      %14 = vector.load %arg4[%c0_11, %c0_12, %c0_13] : memref<1x128x32xbf16, #tpu.memory_space<vmem>>, vector<1x128x32xbf16>
      %15 = vector.shape_cast %14 : vector<1x128x32xbf16> to vector<128x32xbf16>
      %c0_14 = arith.constant 0 : index
      %c0_15 = arith.constant 0 : index
      %16 = vector.load %arg5[%c0_14, %c0_15] : memref<32x32xbf16, #tpu.memory_space<vmem>>, vector<32x32xbf16>
      %cst_16 = arith.constant dense<0.000000e+00> : vector<128x32xf32>
      %17 = tpu.matmul %15, %16, %cst_16 {dimension_numbers = #tpu.dot_dimension_numbers<[1], [0], [0], [1], [0, 0, 1, 1], [], []>} : vector<128x32xbf16>, vector<32x32xbf16>, vector<128x32xf32> -> vector<128x32xf32>
      %c0_17 = arith.constant 0 : index
      %c0_18 = arith.constant 0 : index
      %18 = vector.load %arg6[%c0_17, %c0_18] : memref<1x32xf32, #tpu.memory_space<vmem>>, vector<1x32xf32>
      %19 = vector.broadcast %18 : vector<1x32xf32> to vector<128x32xf32>
      %20 = arith.addf %17, %19 : vector<128x32xf32>
      %21 = arith.truncf %20 : vector<128x32xf32> to vector<128x32xbf16>
      %c0_19 = arith.constant 0 : index
      %c0_20 = arith.constant 0 : index
      %22 = vector.load %arg9[%c0_19, %c0_20] : memref<128x32xbf16, #tpu.memory_space<vmem>>, vector<128x32xbf16>
      tpu.vector_store %arg9[%c0_19, %c0_20], %21 {strides = array<i32>} : memref<128x32xbf16, #tpu.memory_space<vmem>>, vector<128x32xbf16>,
    } else {
    }
    %c0 = arith.constant 0 : index
    %c0_1 = arith.constant 0 : index
    %c0_2 = arith.constant 0 : index
    %3 = vector.load %arg3[%c0, %c0_1, %c0_2] : memref<1x8x32xbf16, #tpu.memory_space<vmem>>, vector<1x8x32xbf16>
    %4 = vector.shape_cast %3 : vector<1x8x32xbf16> to vector<8x32xbf16>
    %c0_3 = arith.constant 0 : index
    %c0_4 = arith.constant 0 : index
    %5 = vector.load %arg9[%c0_3, %c0_4] : memref<128x32xbf16, #tpu.memory_space<vmem>>, vector<128x32xbf16>
    %cst = arith.constant dense<0.000000e+00> : vector<8x128xf32>
    %6 = tpu.matmul %4, %5, %cst {dimension_numbers = #tpu.dot_dimension_numbers<[1], [1], [0], [0], [0, 0, 1, 0], [], []>} : vector<8x32xbf16>, vector<128x32xbf16>, vector<8x128xf32> -> vector<8x128xf32>
    %c0_5 = arith.constant 0 : index
    %c0_6 = arith.constant 0 : index
    %c0_7 = arith.constant 0 : index
    %7 = vector.load %arg7[%c0_5, %c0_6, %c0_7] : memref<1x1x128xf32, #tpu.memory_space<vmem>>, vector<1x1x128xf32>
    %8 = vector.shape_cast %7 : vector<1x1x128xf32> to vector<1x128xf32>
    %9 = vector.broadcast %8 : vector<1x128xf32> to vector<8x128xf32>
    %10 = arith.addf %6, %9 : vector<8x128xf32>
    %c0_8 = arith.constant 0 : index
    %c0_9 = arith.constant 0 : index
    %c0_10 = arith.constant 0 : index
    %11 = vector.load %arg8[%c0_8, %c0_9, %c0_10] : memref<1x8x128xf32, #tpu.memory_space<vmem>>, vector<1x8x128xf32>
    %12 = vector.shape_cast %11 : vector<1x8x128xf32> to vector<8x128xf32>
    %13 = vector.shape_cast %10 : vector<8x128xf32> to vector<1x8x128xf32>
    tpu.vector_store %arg8[%c0_8, %c0_9, %c0_10], %13 {strides = array<i32>} : memref<1x8x128xf32, #tpu.memory_space<vmem>>, vector<1x8x128xf32>,
    return
  }
  func.func @transform_0(%arg0: i32, %arg1: i32, %arg2: i32) -> (i32, i32, i32) {
    %c0_i32 = arith.constant 0 : i32
    %c0_i32_0 = arith.constant 0 : i32
    return %arg0, %arg2, %c0_i32 : i32, i32, i32
  }
  func.func @transform_1(%arg0: i32, %arg1: i32, %arg2: i32) -> (i32, i32, i32) {
    %c0_i32 = arith.constant 0 : i32
    %c0_i32_0 = arith.constant 0 : i32
    return %arg0, %arg1, %c0_i32 : i32, i32, i32
  }
  func.func @transform_2(%arg0: i32, %arg1: i32, %arg2: i32) -> (i32, i32) {
    %c0_i32 = arith.constant 0 : i32
    %c0_i32_0 = arith.constant 0 : i32
    %c0_i32_1 = arith.constant 0 : i32
    return %c0_i32, %c0_i32_0 : i32, i32
  }
  func.func @transform_3(%arg0: i32, %arg1: i32, %arg2: i32) -> (i32, i32) {
    %c0_i32 = arith.constant 0 : i32
    %c0_i32_0 = arith.constant 0 : i32
    %c0_i32_1 = arith.constant 0 : i32
    return %c0_i32, %c0_i32_0 : i32, i32
  }
  func.func @transform_4(%arg0: i32, %arg1: i32, %arg2: i32) -> (i32, i32, i32) {
    %c0_i32 = arith.constant 0 : i32
    %c0_i32_0 = arith.constant 0 : i32
    return %arg0, %c0_i32, %arg1 : i32, i32, i32
  }
  func.func @transform_5(%arg0: i32, %arg1: i32, %arg2: i32) -> (i32, i32, i32) {
    %c0_i32 = arith.constant 0 : i32
    return %arg0, %arg2, %arg1 : i32, i32, i32
  }
}

</mosaic_0001>

<llo_original>
// kernel: tpu_custom_call.1
$region0: #{tpu_custom_call.1}
  #allocation0 [shape = 'u32[]', space=smem, size = 0x4, offset = 0x4, fixed_abs, tag = 'smem constant byte address 0x4 - core index']
  #allocation1 [shape = 'u32[72,128]{1,0:T(1,128)}', space=vmem, size = 0x9000, scoped, tag = 'internal scratch']
  #allocation2 [shape = 'bf16[128,32]{1,0:T(8,128)(2,1)}', space=vmem, size = 0x8000, scoped, tag = 'scratch operand']
  %s0 = inlined_call_operand.vmem [shape: bf16[2,8,32], index: 0, kind: input, shape index: {}]
  %s1 = inlined_call_operand.vmem [shape: bf16[2,128,32], index: 1, kind: input, shape index: {}]
  %s2 = inlined_call_operand.vmem [shape: bf16[32,32], index: 2, kind: input, shape index: {}]
  %s3 = inlined_call_operand.vmem [shape: f32[1,32], index: 3, kind: input, shape index: {}]
  %s4 = inlined_call_operand.vmem [shape: f32[2,1,128], index: 4, kind: input, shape index: {}]
  %s5 = inlined_call_operand.hbm [shape: f32[2,8,128], index: 5, kind: output, shape index: {}]
  %s6 = sld [smem:[#allocation0]]
  $region57: #{tpu_custom_call.1} parent=0
    _
  %s8 = ssub.s32 1, %s6
  %s9 = scalar_select 0, %s8, %s6
  $region1: #{tpu_custom_call.1} parent=0
    #allocation3 [shape = 'u8[8192]{0}', space=vmem, size = 0x2000, scoped, tag = 'output window, operand 0']
    #allocation4 [shape = 's32[2]{0}', space=sflag, size = 0x8, scoped, tag = 'scoped memory for tpu_custom_call.1']
    %10 = vsyncpa [#allocation4], 0
    %s11 = scalar_lea.sflag [#allocation4], 1
    %12 = vsyncpa %s11, 0
    loop: start=0, step=1, limit=4
    $region2: #{tpu_custom_call.1} parent=1 // loop_pre_header
      _
    $region3: #{tpu_custom_call.1} parent=1 // loop_header
      %s14 = sphi 0, %s18
      %p15 = scmp.ge.s32.totalorder %s14, 4
      %s21 = sphi 0, %s40
      %s22 = sphi 0, %s36
      %s23 = sphi 0, %s32
      %s24 = sphi 0, %s21
      %s25 = sphi 0, %s22
      %s26 = sphi 0, %s23
      %s27 = sphi 0, %s24
      %s28 = sphi 0, %s25
      %s29 = sphi 0, %s26
      %s45 = sphi 0, %s47
      %s48 = sphi 0, %s45
      %s49 = sphi 0, %s48
      %s65 = sphi 0, %s49
      %s73 = sphi 0, %s75
      %s76 = sphi 0, %s73
      %s77 = sphi 0, %s76
      %s93 = sphi 0, %s77
      %s97 = sphi 0, %s97
      %s99 = sphi 0, %s97
      %s100 = sphi 0, %s99
      %s114 = sphi 0, %s100
      %s118 = sphi 0, %s118
      %s120 = sphi 0, %s118
      %s121 = sphi 0, %s120
      %s135 = sphi 0, %s121
      %s143 = sphi 0, %s145
      %s146 = sphi 0, %s143
      %s147 = sphi 0, %s146
      %s163 = sphi 0, %s147
      %s173 = sphi 0, %s175
      %s176 = sphi 0, %s173
      %s177 = sphi 0, %s176
      %s193 = sphi 0, %s177
    $region4: #{tpu_custom_call.1} parent=1 // loop_header_branch
      %17 = sbr.rel (%p15) target = $region8
    $region5: #{tpu_custom_call.1} parent=1 // loop_body
      %s19 = ssub.s32 %s14, 1
      %s20 = ssub.s32 %s14, 2
      %s30 = sadd.s32 1, %s23
      %p31 = scmp.ge.s32.totalorder %s30, 1
      %s32 = scalar_select %p31, 0, %s30
      %s33 = sadd.s32 1, %s22
      %s34 = scalar_select %p31, %s33, %s22
      %p35 = scmp.ge.s32.totalorder %s34, 1
      %s36 = scalar_select %p35, 0, %s34
      %s37 = sadd.s32 1, %s21
      %s38 = scalar_select %p35, %s37, %s21
      %p39 = scmp.ge.s32.totalorder %s38, 2
      %s40 = scalar_select %p39, 0, %s38
      %s41 = ssub.s32 %s21, %s40
      %s42 = ssub.s32 %s23, %s32
      %s43 = sor.u32 %s41, %s42
      %p44 = scmp.eq.s32.totalorder %s43, 0
      %s46 = sadd.s32 %s45, 1
      %s47 = scalar_select %p44, %s45, %s46
      %p50 = pneg %p44
      %p51 = scmp.eq.s32.totalorder %s14, 1
      %p52 = por %p50, %p51
      %p53 = scmp.ne.s32.totalorder %s45, %s48
      %p54 = scmp.eq.s32.totalorder %s14, 0
      %p55 = por %p53, %p54
      %p56 = scmp.ne.s32.totalorder %s45, %s48
      %p57 = scmp.eq.s32.totalorder %s19, 1
      %p58 = por %p56, %p57
      %p59 = scmp.ne.s32.totalorder %s48, %s49
      %p60 = scmp.eq.s32.totalorder %s19, 0
      %p61 = por %p59, %p60
      %p62 = scmp.ne.s32.totalorder %s48, %s49
      %p63 = scmp.eq.s32.totalorder %s20, 1
      %p64 = por %p62, %p63
      %p66 = scmp.ne.s32.totalorder %s49, %s65
      %p67 = scmp.eq.s32.totalorder %s20, 0
      %p68 = por %p66, %p67
      %s69 = ssub.s32 %s21, %s40
      %s70 = ssub.s32 %s22, %s36
      %s71 = sor.u32 %s69, %s70
      %p72 = scmp.eq.s32.totalorder %s71, 0
      %s74 = sadd.s32 %s73, 1
      %s75 = scalar_select %p72, %s73, %s74
      %p78 = pneg %p72
      %p79 = scmp.eq.s32.totalorder %s14, 1
      %p80 = por %p78, %p79
      %p81 = scmp.ne.s32.totalorder %s73, %s76
      %p82 = scmp.eq.s32.totalorder %s14, 0
      %p83 = por %p81, %p82
      %p84 = scmp.ne.s32.totalorder %s73, %s76
      %p85 = scmp.eq.s32.totalorder %s19, 1
      %p86 = por %p84, %p85
      %p87 = scmp.ne.s32.totalorder %s76, %s77
      %p88 = scmp.eq.s32.totalorder %s19, 0
      %p89 = por %p87, %p88
      %p90 = scmp.ne.s32.totalorder %s76, %s77
      %p91 = scmp.eq.s32.totalorder %s20, 1
      %p92 = por %p90, %p91
      %p94 = scmp.ne.s32.totalorder %s77, %s93
      %p95 = scmp.eq.s32.totalorder %s20, 0
      %p96 = por %p94, %p95
      %s98 = sadd.s32 %s97, 1
      %p101 = scmp.eq.s32.totalorder %s14, 1
      %p102 = scmp.ne.s32.totalorder %s97, %s99
      %p103 = scmp.eq.s32.totalorder %s14, 0
      %p104 = por %p102, %p103
      %p105 = scmp.ne.s32.totalorder %s97, %s99
      %p106 = scmp.eq.s32.totalorder %s19, 1
      %p107 = por %p105, %p106
      %p108 = scmp.ne.s32.totalorder %s99, %s100
      %p109 = scmp.eq.s32.totalorder %s19, 0
      %p110 = por %p108, %p109
      %p111 = scmp.ne.s32.totalorder %s99, %s100
      %p112 = scmp.eq.s32.totalorder %s20, 1
      %p113 = por %p111, %p112
      %p115 = scmp.ne.s32.totalorder %s100, %s114
      %p116 = scmp.eq.s32.totalorder %s20, 0
      %p117 = por %p115, %p116
      %s119 = sadd.s32 %s118, 1
      %p122 = scmp.eq.s32.totalorder %s14, 1
      %p123 = scmp.ne.s32.totalorder %s118, %s120
      %p124 = scmp.eq.s32.totalorder %s14, 0
      %p125 = por %p123, %p124
      %p126 = scmp.ne.s32.totalorder %s118, %s120
      %p127 = scmp.eq.s32.totalorder %s19, 1
      %p128 = por %p126, %p127
      %p129 = scmp.ne.s32.totalorder %s120, %s121
      %p130 = scmp.eq.s32.totalorder %s19, 0
      %p131 = por %p129, %p130
      %p132 = scmp.ne.s32.totalorder %s120, %s121
      %p133 = scmp.eq.s32.totalorder %s20, 1
      %p134 = por %p132, %p133
      %p136 = scmp.ne.s32.totalorder %s121, %s135
      %p137 = scmp.eq.s32.totalorder %s20, 0
      %p138 = por %p136, %p137
      %s139 = ssub.s32 %s21, %s40
      %s140 = ssub.s32 %s22, %s36
      %s141 = sor.u32 %s139, %s140
      %p142 = scmp.eq.s32.totalorder %s141, 0
      %s144 = sadd.s32 %s143, 1
      %s145 = scalar_select %p142, %s143, %s144
      %p148 = pneg %p142
      %p149 = scmp.eq.s32.totalorder %s14, 1
      %p150 = por %p148, %p149
      %p151 = scmp.ne.s32.totalorder %s143, %s146
      %p152 = scmp.eq.s32.totalorder %s14, 0
      %p153 = por %p151, %p152
      %p154 = scmp.ne.s32.totalorder %s143, %s146
      %p155 = scmp.eq.s32.totalorder %s19, 1
      %p156 = por %p154, %p155
      %p157 = scmp.ne.s32.totalorder %s146, %s147
      %p158 = scmp.eq.s32.totalorder %s19, 0
      %p159 = por %p157, %p158
      %p160 = scmp.ne.s32.totalorder %s146, %s147
      %p161 = scmp.eq.s32.totalorder %s20, 1
      %p162 = por %p160, %p161
      %p164 = scmp.ne.s32.totalorder %s147, %s163
      %p165 = scmp.eq.s32.totalorder %s20, 0
      %p166 = por %p164, %p165
      %s167 = ssub.s32 %s21, %s40
      %s168 = ssub.s32 %s23, %s32
      %s169 = sor.u32 %s167, %s168
      %s170 = ssub.s32 %s22, %s36
      %s171 = sor.u32 %s169, %s170
      %p172 = scmp.eq.s32.totalorder %s171, 0
      %s174 = sadd.s32 %s173, 1
      %s175 = scalar_select %p172, %s173, %s174
      %p178 = pneg %p172
      %p179 = scmp.eq.s32.totalorder %s14, 1
      %p180 = por %p178, %p179
      %p181 = scmp.ne.s32.totalorder %s173, %s176
      %p182 = scmp.eq.s32.totalorder %s14, 0
      %p183 = por %p181, %p182
      %p184 = scmp.ne.s32.totalorder %s173, %s176
      %p185 = scmp.eq.s32.totalorder %s19, 1
      %p186 = por %p184, %p185
      %p187 = scmp.ne.s32.totalorder %s176, %s177
      %p188 = scmp.eq.s32.totalorder %s19, 0
      %p189 = por %p187, %p188
      %p190 = scmp.ne.s32.totalorder %s176, %s177
      %p191 = scmp.eq.s32.totalorder %s20, 1
      %p192 = por %p190, %p191
      %p194 = scmp.ne.s32.totalorder %s177, %s193
      %p195 = scmp.eq.s32.totalorder %s20, 0
      %p196 = por %p194, %p195
      %p197 = scmp.le.s32.totalorder 1, %s14
      %p198 = scmp.lt.s32.totalorder %s14, 3
      %p199 = pnand %p197, %p198
      %p200 = pneg %p199
      // Predicated region
      $region9: #{tpu_custom_call.1} parent=5 // pred_check
        _
      $region10: #{tpu_custom_call.1} parent=5 // pred_check_branch
        %202 = sbr.rel (%p199) target = $region12
      $region11: #{tpu_custom_call.1} parent=5 // pred_region
        %s203 = ssub.s32 %s14, 1
        // Predicated region
        $region13: #{tpu_custom_call.1} parent=11 // pred_check
          %p204 = pneg %p110
        $region14: #{tpu_custom_call.1} parent=11 // pred_check_branch
          %206 = sbr.rel (%p204) target = $region16
        $region15: #{tpu_custom_call.1} parent=11 // pred_region
          _
        $region16: #{tpu_custom_call.1} parent=11 // pred_fallthru
          _
        // Predicated region
        $region17: #{tpu_custom_call.1} parent=11 // pred_check
          %p207 = pneg %p131
        $region18: #{tpu_custom_call.1} parent=11 // pred_check_branch
          %209 = sbr.rel (%p207) target = $region20
        $region19: #{tpu_custom_call.1} parent=11 // pred_region
          _
        $region20: #{tpu_custom_call.1} parent=11 // pred_fallthru
          _
      $region12: #{tpu_custom_call.1} parent=5 // pred_fallthru
        _
      %p210 = scmp.lt.s32.totalorder %s14, 2
      // Predicated region
      $region21: #{tpu_custom_call.1} parent=5 // pred_check
        %p211 = pneg %p210
      $region22: #{tpu_custom_call.1} parent=5 // pred_check_branch
        %213 = sbr.rel (%p211) target = $region24
      $region23: #{tpu_custom_call.1} parent=5 // pred_region
        // Predicated region
        $region25: #{tpu_custom_call.1} parent=23 // pred_check
          %p214 = pneg %p55
        $region26: #{tpu_custom_call.1} parent=23 // pred_check_branch
          %216 = sbr.rel (%p214) target = $region28
        $region27: #{tpu_custom_call.1} parent=23 // pred_region
          %p217 = scmp.lt.s32.totalorder %s21, 1
          %s218 = scalar_select %p217, %s21, 1
          %p219 = scmp.lt.s32.totalorder %s23, 0
          %s220 = scalar_select %p219, %s23, 0
          %s221 = sadd.s32 %s220, %s218
          %s222 = smul.addr %s221, 4
          %s223 = scalar_lea.vmem %s0, %s222
        $region28: #{tpu_custom_call.1} parent=23 // pred_fallthru
          _
        // Predicated region
        $region29: #{tpu_custom_call.1} parent=23 // pred_check
          %p224 = pneg %p83
        $region30: #{tpu_custom_call.1} parent=23 // pred_check_branch
          %226 = sbr.rel (%p224) target = $region32
        $region31: #{tpu_custom_call.1} parent=23 // pred_region
          %s227 = smul.u32 16, %s22
          %p228 = scmp.lt.s32.totalorder %s21, 1
          %s229 = scalar_select %p228, %s21, 1
          %p230 = scmp.lt.s32.totalorder %s227, 15
          %s231 = scalar_select %p230, %s227, 15
          %s232 = smul.addr %s229, 16
          %s233 = sadd.s32 %s231, %s232
          %s234 = smul.addr %s233, 4
          %s235 = scalar_lea.vmem %s1, %s234
          %s236 = smul.u32 16, %s22
        $region32: #{tpu_custom_call.1} parent=23 // pred_fallthru
          _
        // Predicated region
        $region33: #{tpu_custom_call.1} parent=23 // pred_check
          %p237 = pneg %p153
        $region34: #{tpu_custom_call.1} parent=23 // pred_check_branch
          %239 = sbr.rel (%p237) target = $region36
        $region35: #{tpu_custom_call.1} parent=23 // pred_region
          %p240 = scmp.lt.s32.totalorder %s21, 1
          %s241 = scalar_select %p240, %s21, 1
          %p242 = scmp.lt.s32.totalorder %s22, 0
          %s243 = scalar_select %p242, %s22, 0
          %s244 = sadd.s32 %s243, %s241
          %s245 = scalar_lea.vmem %s4, %s244
        $region36: #{tpu_custom_call.1} parent=23 // pred_fallthru
          _
      $region24: #{tpu_custom_call.1} parent=5 // pred_fallthru
        _
      %p246 = scmp.le.s32.totalorder 1, %s14
      %p247 = scmp.lt.s32.totalorder %s14, 3
      %p248 = pnand %p246, %p247
      %p249 = pneg %p248
      // Predicated region
      $region37: #{tpu_custom_call.1} parent=5 // pred_check
        _
      $region38: #{tpu_custom_call.1} parent=5 // pred_check_branch
        %251 = sbr.rel (%p248) target = $region40
      $region39: #{tpu_custom_call.1} parent=5 // pred_region
        %s252 = ssub.s32 %s14, 1
        %p253 = scmp.lt.s32.totalorder %s24, 1
        %s254 = scalar_select %p253, %s24, 1
        %p255 = scmp.lt.s32.totalorder %s26, 0
        %s256 = scalar_select %p255, %s26, 0
        %s257 = sadd.s32 %s256, %s254
        %s258 = smul.addr %s257, 4
        %s259 = scalar_lea.vmem %s0, %s258
        %p260 = pneg %p61
        %p261 = pneg %p58
        %s262 = smul.u32 16, %s25
        %p263 = scmp.lt.s32.totalorder %s24, 1
        %s264 = scalar_select %p263, %s24, 1
        %p265 = scmp.lt.s32.totalorder %s262, 15
        %s266 = scalar_select %p265, %s262, 15
        %s267 = smul.addr %s264, 16
        %s268 = sadd.s32 %s266, %s267
        %s269 = smul.addr %s268, 4
        %s270 = scalar_lea.vmem %s1, %s269
        %p271 = pneg %p89
        %p272 = pneg %p86
        %p273 = pneg %p110
        %p274 = pneg %p107
        %p275 = pneg %p131
        %p276 = pneg %p128
        %p277 = scmp.lt.s32.totalorder %s24, 1
        %s278 = scalar_select %p277, %s24, 1
        %p279 = scmp.lt.s32.totalorder %s25, 0
        %s280 = scalar_select %p279, %s25, 0
        %s281 = sadd.s32 %s280, %s278
        %s282 = scalar_lea.vmem %s4, %s281
        %p283 = pneg %p159
        %p284 = pneg %p156
        %p285 = pneg %p189
        %p286 = pneg %p186
        %s287 = sand.u32 %s176, 1
        %s288 = scalar_lea.sflag [#allocation4], %s287
        %s289 = sand.u32 %s176, 1
        %s290 = smul.addr %s289, 8
        %s291 = scalar_lea.vmem [#allocation3], %s290
        %p292 = scmp.lt.s32.totalorder %s24, 1
        %s293 = scalar_select %p292, %s24, 1
        %p294 = scmp.lt.s32.totalorder %s26, 0
        %s295 = scalar_select %p294, %s26, 0
        %s296 = sadd.s32 %s295, %s293
        %s297 = smul.addr %s296, 4
        %s298 = scalar_lea.vmem %s0, %s297
        %s299 = smul.u32 16, %s25
        %p300 = scmp.lt.s32.totalorder %s24, 1
        %s301 = scalar_select %p300, %s24, 1
        %p302 = scmp.lt.s32.totalorder %s299, 15
        %s303 = scalar_select %p302, %s299, 15
        %s304 = smul.addr %s301, 16
        %s305 = sadd.s32 %s303, %s304
        %s306 = smul.addr %s305, 4
        %s307 = scalar_lea.vmem %s1, %s306
        %s308 = smul.u32 16, %s25
        %p309 = scmp.lt.s32.totalorder %s24, 1
        %s310 = scalar_select %p309, %s24, 1
        %p311 = scmp.lt.s32.totalorder %s25, 0
        %s312 = scalar_select %p311, %s25, 0
        %s313 = sadd.s32 %s312, %s310
        %s314 = scalar_lea.vmem %s4, %s313
        %p316 = scmp.eq.s32.totalorder %s26, 0
        // Predicated region
        $region41: #{tpu_custom_call.1} parent=39 // pred_check
          %p317 = pneg %p316
        $region42: #{tpu_custom_call.1} parent=39 // pred_check_branch
          %319 = sbr.rel (%p317) target = $region44
        $region43: #{tpu_custom_call.1} parent=39 // pred_region
          %v320 = vld [vmem:[%s307] sm:$0xf]
          %v321 = vld [vmem:[%s307 + $0x4] sm:$0xf]
          %v322 = vld [vmem:[%s307 + $0x8] sm:$0xf]
          %v323 = vld [vmem:[%s307 + $0xc] sm:$0xf]
          %v324 = vld [vmem:[%s307 + $0x10] sm:$0xf]
          %v325 = vld [vmem:[%s307 + $0x14] sm:$0xf]
          %v326 = vld [vmem:[%s307 + $0x18] sm:$0xf]
          %v327 = vld [vmem:[%s307 + $0x1c] sm:$0xf]
          %v328 = vld [vmem:[%s307 + $0x20] sm:$0xf]
          %v329 = vld [vmem:[%s307 + $0x24] sm:$0xf]
          %v330 = vld [vmem:[%s307 + $0x28] sm:$0xf]
          %v331 = vld [vmem:[%s307 + $0x2c] sm:$0xf]
          %v332 = vld [vmem:[%s307 + $0x30] sm:$0xf]
          %v333 = vld [vmem:[%s307 + $0x34] sm:$0xf]
          %v334 = vld [vmem:[%s307 + $0x38] sm:$0xf]
          %v335 = vld [vmem:[%s307 + $0x3c] sm:$0xf]
          %v336 = vld [vmem:[%s2] sm:$0xf]
          %v337 = vld [vmem:[%s2 + $0x4] sm:$0xf]
          %v338 = vld [vmem:[%s2 + $0x8] sm:$0xf]
          %v339 = vld [vmem:[%s2 + $0xc] sm:$0xf]
          %v340 = vld [vmem:[%s3] sm:$0x1]
          %v342 = vperm.slane %v340, 0
          %v360 = vunpack.c.l.b16 %v320
          %v361 = vunpack.c.l.b16 %v321
          %v362 = vunpack.c.l.b16 %v322
          %v363 = vunpack.c.l.b16 %v323
          %v364 = vunpack.c.l.b16 %v324
          %v365 = vunpack.c.l.b16 %v325
          %v366 = vunpack.c.l.b16 %v326
          %v367 = vunpack.c.l.b16 %v327
          %v368 = vunpack.c.l.b16 %v328
          %v369 = vunpack.c.l.b16 %v329
          %v370 = vunpack.c.l.b16 %v330
          %v371 = vunpack.c.l.b16 %v331
          %v372 = vunpack.c.l.b16 %v332
          %v373 = vunpack.c.l.b16 %v333
          %v374 = vunpack.c.l.b16 %v334
          %v375 = vunpack.c.l.b16 %v335
          %v376 = vpack.c.b16 %v361, %v360
          %v377 = vpack.c.b16 %v363, %v362
          %v378 = vpack.c.b16 %v365, %v364
          %v379 = vpack.c.b16 %v367, %v366
          %v380 = vpack.c.b16 %v369, %v368
          %v381 = vpack.c.b16 %v371, %v370
          %v382 = vpack.c.b16 %v373, %v372
          %v383 = vpack.c.b16 %v375, %v374
          %v388 = vunpack.c.l.b16 %v336
          %v389 = vunpack.c.l.b16 %v337
          %v390 = vunpack.c.l.b16 %v338
          %v391 = vunpack.c.l.b16 %v339
          %v392 = vpack.c.b16 %v389, %v388
          %v393 = vpack.c.b16 %v391, %v390
          %vm396 = vcmask 261120
          %v398 = vsel %vm396, %v376, 0
          %v401 = vsel %vm396, %v377, 0
          %v404 = vsel %vm396, %v378, 0
          %v407 = vsel %vm396, %v379, 0
          %v410 = vsel %vm396, %v380, 0
          %v413 = vsel %vm396, %v381, 0
          %v416 = vsel %vm396, %v382, 0
          %v419 = vsel %vm396, %v383, 0
          %421 = vmatpush.bf16.msra.mxu0 0
          %422 = vmatpush.bf16.msra.mxu0 0
          %423 = vmatpush.bf16.msra.mxu0 0
          %424 = vmatpush.bf16.msra.mxu0 0
          %425 = vmatpush.bf16.msra.mxu0 0
          %426 = vmatpush.bf16.msra.mxu0 0
          %427 = vmatpush.bf16.msra.mxu0 %v393
          %428 = vmatpush.bf16.msra.mxu0 %v392
          %429 = vmatmul.bf16.gmra.mxu0 %v398
          %v430 = vpop.f32.mrf.mxu0
          %v431 = vadd.f32 %v342, %v430
          %v432 = vpop.f32.mrf.mxu0
          %v433 = vadd.f32 %v342, %v432
          %434 = vmatmul.bf16.gmra.mxu0 %v401
          %v435 = vpop.f32.mrf.mxu0
          %v436 = vadd.f32 %v342, %v435
          %v437 = vpop.f32.mrf.mxu0
          %v438 = vadd.f32 %v342, %v437
          %439 = vmatmul.bf16.gmra.mxu0 %v404
          %v440 = vpop.f32.mrf.mxu0
          %v441 = vadd.f32 %v342, %v440
          %v442 = vpop.f32.mrf.mxu0
          %v443 = vadd.f32 %v342, %v442
          %444 = vmatmul.bf16.gmra.mxu0 %v407
          %v445 = vpop.f32.mrf.mxu0
          %v446 = vadd.f32 %v342, %v445
          %v447 = vpop.f32.mrf.mxu0
          %v448 = vadd.f32 %v342, %v447
          %449 = vmatmul.bf16.gmra.mxu0 %v410
          %v450 = vpop.f32.mrf.mxu0
          %v451 = vadd.f32 %v342, %v450
          %v452 = vpop.f32.mrf.mxu0
          %v453 = vadd.f32 %v342, %v452
          %454 = vmatmul.bf16.gmra.mxu0 %v413
          %v455 = vpop.f32.mrf.mxu0
          %v456 = vadd.f32 %v342, %v455
          %v457 = vpop.f32.mrf.mxu0
          %v458 = vadd.f32 %v342, %v457
          %459 = vmatmul.bf16.gmra.mxu0 %v416
          %v460 = vpop.f32.mrf.mxu0
          %v461 = vadd.f32 %v342, %v460
          %v462 = vpop.f32.mrf.mxu0
          %v463 = vadd.f32 %v342, %v462
          %464 = vmatmul.bf16.gmra.mxu0 %v419
          %v465 = vpop.f32.mrf.mxu0
          %v466 = vadd.f32 %v342, %v465
          %v467 = vpop.f32.mrf.mxu0
          %v468 = vadd.f32 %v342, %v467
          %469 = vdwg.mxu0
          %v470 = vpack.c.bf16 %v431, %v431
          %v471 = vpack.c.bf16 %v433, %v433
          %v472 = vpack.c.bf16 %v436, %v436
          %v473 = vpack.c.bf16 %v438, %v438
          %v474 = vpack.c.bf16 %v441, %v441
          %v475 = vpack.c.bf16 %v443, %v443
          %v476 = vpack.c.bf16 %v446, %v446
          %v477 = vpack.c.bf16 %v448, %v448
          %v478 = vpack.c.bf16 %v451, %v451
          %v479 = vpack.c.bf16 %v453, %v453
          %v480 = vpack.c.bf16 %v456, %v456
          %v481 = vpack.c.bf16 %v458, %v458
          %v482 = vpack.c.bf16 %v461, %v461
          %v483 = vpack.c.bf16 %v463, %v463
          %v484 = vpack.c.bf16 %v466, %v466
          %v485 = vpack.c.bf16 %v468, %v468
          %vm486 = vcmask 257024
          %487 = vst.msk [vmem:[#allocation2] sm:$0xf] %vm486, %v470
          %488 = vst.msk [vmem:[#allocation2 + $0x4] sm:$0xf] %vm486, %v471
          %489 = vst.msk [vmem:[#allocation2 + $0x8] sm:$0xf] %vm486, %v472
          %490 = vst.msk [vmem:[#allocation2 + $0xc] sm:$0xf] %vm486, %v473
          %491 = vst.msk [vmem:[#allocation2 + $0x10] sm:$0xf] %vm486, %v474
          %492 = vst.msk [vmem:[#allocation2 + $0x14] sm:$0xf] %vm486, %v475
          %493 = vst.msk [vmem:[#allocation2 + $0x18] sm:$0xf] %vm486, %v476
          %494 = vst.msk [vmem:[#allocation2 + $0x1c] sm:$0xf] %vm486, %v477
          %495 = vst.msk [vmem:[#allocation2 + $0x20] sm:$0xf] %vm486, %v478
          %496 = vst.msk [vmem:[#allocation2 + $0x24] sm:$0xf] %vm486, %v479
          %497 = vst.msk [vmem:[#allocation2 + $0x28] sm:$0xf] %vm486, %v480
          %498 = vst.msk [vmem:[#allocation2 + $0x2c] sm:$0xf] %vm486, %v481
          %499 = vst.msk [vmem:[#allocation2 + $0x30] sm:$0xf] %vm486, %v482
          %500 = vst.msk [vmem:[#allocation2 + $0x34] sm:$0xf] %vm486, %v483
          %501 = vst.msk [vmem:[#allocation2 + $0x38] sm:$0xf] %vm486, %v484
          %502 = vst.msk [vmem:[#allocation2 + $0x3c] sm:$0xf] %vm486, %v485
        $region44: #{tpu_custom_call.1} parent=39 // pred_fallthru
          _
        %v503 = vld [vmem:[%s298] sm:$0xf]
        %v504 = vld [vmem:[#allocation2] sm:$0xf]
        %v505 = vld [vmem:[#allocation2 + $0x4] sm:$0xf]
        %v506 = vld [vmem:[#allocation2 + $0x8] sm:$0xf]
        %v507 = vld [vmem:[#allocation2 + $0xc] sm:$0xf]
        %v508 = vld [vmem:[#allocation2 + $0x10] sm:$0xf]
        %v509 = vld [vmem:[#allocation2 + $0x14] sm:$0xf]
        %v510 = vld [vmem:[#allocation2 + $0x18] sm:$0xf]
        %v511 = vld [vmem:[#allocation2 + $0x1c] sm:$0xf]
        %v512 = vld [vmem:[#allocation2 + $0x20] sm:$0xf]
        %v513 = vld [vmem:[#allocation2 + $0x24] sm:$0xf]
        %v514 = vld [vmem:[#allocation2 + $0x28] sm:$0xf]
        %v515 = vld [vmem:[#allocation2 + $0x2c] sm:$0xf]
        %v516 = vld [vmem:[#allocation2 + $0x30] sm:$0xf]
        %v517 = vld [vmem:[#allocation2 + $0x34] sm:$0xf]
        %v518 = vld [vmem:[#allocation2 + $0x38] sm:$0xf]
        %v519 = vld [vmem:[#allocation2 + $0x3c] sm:$0xf]
        %v520 = vld [vmem:[%s314] sm:$0x1]
        %v522 = vperm.slane %v520, 0
        %v540 = vunpack.c.l.b16 %v504
        %v541 = vunpack.c.l.b16 %v505
        %v542 = vunpack.c.l.b16 %v506
        %v543 = vunpack.c.l.b16 %v507
        %v544 = vunpack.c.l.b16 %v508
        %v545 = vunpack.c.l.b16 %v509
        %v546 = vunpack.c.l.b16 %v510
        %v547 = vunpack.c.l.b16 %v511
        %v548 = vunpack.c.l.b16 %v512
        %v549 = vunpack.c.l.b16 %v513
        %v550 = vunpack.c.l.b16 %v514
        %v551 = vunpack.c.l.b16 %v515
        %v552 = vunpack.c.l.b16 %v516
        %v553 = vunpack.c.l.b16 %v517
        %v554 = vunpack.c.l.b16 %v518
        %v555 = vunpack.c.l.b16 %v519
        %v556 = vpack.c.b16 %v541, %v540
        %v557 = vpack.c.b16 %v543, %v542
        %v558 = vpack.c.b16 %v545, %v544
        %v559 = vpack.c.b16 %v547, %v546
        %v560 = vpack.c.b16 %v549, %v548
        %v561 = vpack.c.b16 %v551, %v550
        %v562 = vpack.c.b16 %v553, %v552
        %v563 = vpack.c.b16 %v555, %v554
        %vm564 = vcmask 261120
        %v566 = vsel %vm564, %v503, 0
        %v569 = vsel %vm564, %v556, 0
        %v572 = vsel %vm564, %v557, 0
        %v575 = vsel %vm564, %v558, 0
        %v578 = vsel %vm564, %v559, 0
        %v581 = vsel %vm564, %v560, 0
        %v584 = vsel %vm564, %v561, 0
        %v587 = vsel %vm564, %v562, 0
        %v590 = vsel %vm564, %v563, 0
        %592 = vmatpush.bf16.xpose.msra.mxu0 %v590
        %593 = vmatpush.bf16.xpose.msra.mxu0 %v587
        %594 = vmatpush.bf16.xpose.msra.mxu0 %v584
        %595 = vmatpush.bf16.xpose.msra.mxu0 %v581
        %596 = vmatpush.bf16.xpose.msra.mxu0 %v578
        %597 = vmatpush.bf16.xpose.msra.mxu0 %v575
        %598 = vmatpush.bf16.xpose.msra.mxu0 %v572
        %599 = vmatpush.bf16.xpose.msra.mxu0 %v569
        %600 = vmatmul.bf16.gmra.mxu0 %v566
        %v601 = vpop.f32.mrf.mxu0
        %v602 = vadd.f32 %v522, %v601
        %v603 = vpop.f32.mrf.mxu0
        %604 = vdwg.mxu0
        %605 = vst [vmem:[%s291] sm:$0xff] %v602
        %s606 = sand.u32 %s176, 1
        %s607 = scalar_lea.sflag [#allocation4], %s606
        %s608 = sand.u32 %s176, 1
        %s609 = smul.addr %s608, 8
        %s610 = scalar_lea.vmem [#allocation3], %s609
        // Predicated region
        $region45: #{tpu_custom_call.1} parent=39 // pred_check
          %p611 = pneg %p186
        $region46: #{tpu_custom_call.1} parent=39 // pred_check_branch
          %613 = sbr.rel (%p611) target = $region48
        $region47: #{tpu_custom_call.1} parent=39 // pred_region
          %615 = vsyncadd %s607, 0
          %s616 = sadd.s32 %s25, %s26
          %s617 = sadd.s32 %s616, %s24
          %s618 = smul.addr %s617, 8
          %s619 = scalar_lea.hbm %s5, %s618
          %s621 = sshll.u32 %s610, 4
          %s622 = int_to_ptr.vmem [resolvable:$true] %s621
          %s623 = sshll.u32 %s619, 4
          %s624 = int_to_ptr.hbm [resolvable:$true] %s623
          %626 = dma.vmem_to_hbm [thread:$0]  %s622, 128, %s624, %s607
        $region48: #{tpu_custom_call.1} parent=39 // pred_fallthru
          _
      $region40: #{tpu_custom_call.1} parent=5 // pred_fallthru
        _
      %p627 = scmp.le.s32.totalorder 2, %s14
      // Predicated region
      $region49: #{tpu_custom_call.1} parent=5 // pred_check
        %p628 = pneg %p627
      $region50: #{tpu_custom_call.1} parent=5 // pred_check_branch
        %630 = sbr.rel (%p628) target = $region52
      $region51: #{tpu_custom_call.1} parent=5 // pred_region
        %s631 = ssub.s32 %s14, 2
        // Predicated region
        $region53: #{tpu_custom_call.1} parent=51 // pred_check
          %p632 = pneg %p192
        $region54: #{tpu_custom_call.1} parent=51 // pred_check_branch
          %634 = sbr.rel (%p632) target = $region56
        $region55: #{tpu_custom_call.1} parent=51 // pred_region
          %s635 = sand.u32 %s177, 1
          %s636 = scalar_lea.sflag [#allocation4], %s635
          %s637 = sand.u32 %s177, 1
          %s638 = smul.addr %s637, 8
          %s639 = scalar_lea.vmem [#allocation3], %s638
          %641 = dma.done %s636, 128
        $region56: #{tpu_custom_call.1} parent=51 // pred_fallthru
          _
      $region52: #{tpu_custom_call.1} parent=5 // pred_fallthru
        _
    $region6: #{tpu_custom_call.1} parent=1 // loop_footer
      %s18 = sadd.s32 1, %s14
    $region7: #{tpu_custom_call.1} parent=1 // loop_footer_branch
      %13 = sbr.rel target = $region3
    $region8: #{tpu_custom_call.1} parent=1 // loop_exit
      _
    %642 = vsyncpa [#allocation4], 1
    %s643 = scalar_lea.sflag [#allocation4], 1
    %644 = vsyncpa %s643, 1

</llo_original>
